<compile_context>
chip_gen: v6e
topology: v6e:2x2x1
jax: 0.10.0
libtpu: 0.0.40
codegen_flags: <defaults>
</compile_context>

<pallas_src>
import functools

import jax
import jax.numpy as jnp
import numpy as np
from jax.experimental import pallas as pl
from jax.experimental.pallas import tpu as pltpu

_LANES = 128          # lane-dense last dim
_TILE_ROWS = 2048     # 2048 x 128 x 4B = 1 MiB per f32 block (2-deep in+out ≈ 4 MiB VMEM)


def _copy_kernel(x_ref, o_ref):
    # Identity on the current lane-dense (rows, 128) tile.
    o_ref[...] = x_ref[...]


def _identity_copy_2d(flat2d):
    """Tiled, aliased identity copy of a lane-dense [rows, 128] array."""
    rows, lanes = flat2d.shape
    if rows <= _TILE_ROWS:
        # Block equals the full array dims (escape hatch of the (8,128) rule).
        block_rows = rows
        grid = (1,)
    else:
        block_rows = _TILE_ROWS
        grid = (pl.cdiv(rows, _TILE_ROWS),)   # ragged last block is masked by Pallas

    return pl.pallas_call(
        _copy_kernel,
        out_shape=jax.ShapeDtypeStruct((rows, lanes), flat2d.dtype),
        grid_spec=pltpu.PrefetchScalarGridSpec(
            num_scalar_prefetch=0,
            grid=grid,
            in_specs=[pl.BlockSpec((block_rows, lanes), lambda i: (i, 0))],
            out_specs=pl.BlockSpec((block_rows, lanes), lambda i: (i, 0)),
        ),
        compiler_params=pltpu.CompilerParams(
            dimension_semantics=("parallel",),   # shards across TCs on v7x; no-op on v5e/v6e
        ),
        # Output buffer is the (donated) input buffer: no fresh HBM allocation.
        input_output_aliases={0: 0},
    )(flat2d)


@functools.partial(jax.jit, donate_argnums=(0,))
def esm1b_classifier_forward(x):
    """Identity forward pass of Esm1bClassifier, routed through a Pallas kernel.

    x: any-shaped float/int array (e.g. [B, S, H] token embeddings).
    Returns an array identical to x.
    """
    orig_shape = x.shape
    total = x.size

    flat = x.reshape(-1)
    pad = (-total) % _LANES
    if pad:
        # Only hit when the element count is not 128-divisible; keeps the lane
        # axis 128-dense so stores are never masked partial vst.msk.
        flat = jnp.pad(flat, (0, pad))
    flat2d = flat.reshape(-1, _LANES)

    out2d = _identity_copy_2d(flat2d)

    out = out2d.reshape(-1)
    if pad:
        out = out[:total]
    return out.reshape(orig_shape)


if __name__ == "__main__":
    # Deterministic small example input consistent with a token-embedding batch:
    # batch=2, seq=8, hidden=32.  (2*8*32 = 512 = 4 lane-dense rows of 128.)
    key = jax.random.PRNGKey(0)
    x = jax.random.normal(key, (2, 8, 32), dtype=jnp.float32)

    # NOTE: the ESM-1b backbone parameters declared in __init__ are never used
    # in forward(), so no weights are needed for the forward semantics.
    # TODO(synk): if the backbone were actually applied in forward(), its
    # transformer layers would need their own Pallas kernels.

    # Snapshot to host before the call: the input buffer is donated/aliased.
    x_host = np.asarray(jax.device_get(x))

    y = esm1b_classifier_forward(x)
    jax.block_until_ready(y)

    assert y.shape == (2, 8, 32) and y.dtype == jnp.float32
    assert np.array_equal(np.asarray(jax.device_get(y)), x_host)
    print("KERNEL_OK")
</pallas_src>

<mosaic_0001>
module attributes {stable_mosaic.version = 11 : i64} {
  func.func @_copy_kernel(%arg0: i32, %arg1: memref<4x128xf32, #tpu.memory_space<vmem>>, %arg2: memref<4x128xf32, #tpu.memory_space<vmem>>) attributes {dimension_semantics = [#tpu.dimension_semantics<parallel>], iteration_bounds = array<i64: 1>, scalar_prefetch = 0 : i64, scratch_operands = 0 : i64, tpu.core_type = #tpu.core_type<tc>, window_params = [{transform_indices = @transform_0, window_bounds = array<i64: 4, 128>}, {transform_indices = @transform_1, window_bounds = array<i64: 4, 128>}]} {
    %c0 = arith.constant 0 : index
    %c0_0 = arith.constant 0 : index
    %0 = vector.load %arg1[%c0, %c0_0] : memref<4x128xf32, #tpu.memory_space<vmem>>, vector<4x128xf32>
    %c0_1 = arith.constant 0 : index
    %c0_2 = arith.constant 0 : index
    %1 = vector.load %arg2[%c0_1, %c0_2] : memref<4x128xf32, #tpu.memory_space<vmem>>, vector<4x128xf32>
    tpu.vector_store %arg2[%c0_1, %c0_2], %0 {strides = array<i32>} : memref<4x128xf32, #tpu.memory_space<vmem>>, vector<4x128xf32>,
    return
  }
  func.func @transform_0(%arg0: i32) -> (i32, i32) {
    %c0_i32 = arith.constant 0 : i32
    %c0_i32_0 = arith.constant 0 : i32
    return %arg0, %c0_i32 : i32, i32
  }
  func.func @transform_1(%arg0: i32) -> (i32, i32) {
    %c0_i32 = arith.constant 0 : i32
    %c0_i32_0 = arith.constant 0 : i32
    return %arg0, %c0_i32 : i32, i32
  }
}

</mosaic_0001>

<llo_original>
// kernel: esm1b_classifier_forward.1
$region0: #{esm1b_classifier_forward.1}
  #allocation0 [shape = 'u32[]', space=smem, size = 0x4, offset = 0x4, fixed_abs, tag = 'smem constant byte address 0x4 - core index']
  #allocation1 [shape = 'u32[144,128]{1,0:T(1,128)}', space=vmem, size = 0x12000, scoped, tag = 'internal scratch']
  %s0 = inlined_call_operand.vmem [shape: f32[4,128], index: 0, kind: input, shape index: {}, may-alias: {0,1}]
  %s1 = inlined_call_operand.vmem [shape: f32[4,128], index: 1, kind: output, shape index: {}, may-alias: {0,1}]
  %s2 = sld [smem:[#allocation0]]
  $region14: #{esm1b_classifier_forward.1} parent=0
    _
  %s4 = ssub.s32 1, %s2
  %s5 = scalar_select 0, %s4, %s2
  // Predicated region
  $region2: #{esm1b_classifier_forward.1} parent=0 // pred_check
    _
  $region3: #{esm1b_classifier_forward.1} parent=0 // pred_check_branch
    %7 = sbr.rel (0) target = $region5
  $region4: #{esm1b_classifier_forward.1} parent=0 // pred_region
    _
  $region5: #{esm1b_classifier_forward.1} parent=0 // pred_fallthru
    _
  %v8 = vld [vmem:[%s0] sm:$0xf]
  %9 = vst [vmem:[%s1] sm:$0xf] %v8
  // Predicated region
  $region6: #{esm1b_classifier_forward.1} parent=0 // pred_check
    _
  $region7: #{esm1b_classifier_forward.1} parent=0 // pred_check_branch
    %11 = sbr.rel (0) target = $region9
  $region8: #{esm1b_classifier_forward.1} parent=0 // pred_region
    _
  $region9: #{esm1b_classifier_forward.1} parent=0 // pred_fallthru
    _
  // Predicated region
  $region10: #{esm1b_classifier_forward.1} parent=0 // pred_check
    _
  $region11: #{esm1b_classifier_forward.1} parent=0 // pred_check_branch
    %13 = sbr.rel (0) target = $region13
  $region12: #{esm1b_classifier_forward.1} parent=0 // pred_region
    _
  $region13: #{esm1b_classifier_forward.1} parent=0 // pred_fallthru
    _

</llo_original>
